<compile_context>
chip_gen: v5e
topology: v5e:2x2
jax: 0.10.0
libtpu: 0.0.40
codegen_flags: <defaults>
</compile_context>

<pallas_src>
import functools
import math

import jax
import jax.numpy as jnp
from jax.experimental import pallas as pl
from jax.experimental.pallas import tpu as pltpu


_HEAD_WIDTH = 128  # lane-dense head/output width (col 0 = mu, col 1 = std, rest zero)


def _round_up(x, m):
    return (x + m - 1) // m * m


def _leaky_relu(x, slope=0.01):
    return jnp.where(x > 0, x, slope * x)


def _softplus(x):
    # numerically stable log(1 + exp(x)); exp/log1p run on the EUP slot.
    return jnp.maximum(x, 0.0) + jnp.log1p(jnp.exp(-jnp.abs(x)))


def encoder_kernel(x_ref, w1_ref, b1_ref, w2_ref, b2_ref, wh_ref, bh_ref,
                   out_ref, acc_ref, *, pos_mean):
    k = pl.program_id(1)

    @pl.when(k == 0)
    def _():
        acc_ref[...] = jnp.zeros_like(acc_ref)

    # fc1 partial product over this K tile (BN1 folded into w1/b1). The x tile is
    # cast to the matmul dtype here (VPU op hidden under DMA) so no wrapper-side
    # cast/pad prepass of x is needed on the resident-w1 fast path.
    acc_ref[...] += jnp.dot(x_ref[...].astype(w1_ref.dtype), w1_ref[...],
                            preferred_element_type=jnp.float32)

    @pl.when(k == pl.num_programs(1) - 1)
    def _():
        # Layer-1 epilogue in f32 (dropout = identity in eval mode).
        h1 = _leaky_relu(acc_ref[...] + b1_ref[...])

        # fc2 (+ folded BN2) -> LeakyReLU.
        h2 = jnp.dot(h1.astype(w2_ref.dtype), w2_ref[...],
                     preferred_element_type=jnp.float32) + b2_ref[...]
        h2 = _leaky_relu(h2)

        # Fused, lane-dense mu/std heads (columns 2.. are zero-weight padding).
        heads = jnp.dot(h2.astype(wh_ref.dtype), wh_ref[...],
                        preferred_element_type=jnp.float32) + bh_ref[...]
        sp = _softplus(heads)
        if pos_mean:
            heads = sp
        else:
            col = jax.lax.broadcasted_iota(jnp.int32, heads.shape, 1)
            heads = jnp.where(col == 0, heads, sp)   # softplus only on std column
        out_ref[...] = heads.astype(out_ref.dtype)


def _vmem_budget_bytes():
    """Generation-aware scoped-VMEM budget (leave ~25% headroom).

    v5e/v6e: 128 MiB physical -> ~96 MiB; v7x: 64 MiB per core -> ~48 MiB."""
    try:
        cap = int(pltpu.get_tpu_info().vmem_capacity_bytes)
    except Exception:
        cap = 64 << 20  # conservative fallback (v7x per-core physical VMEM)
    return (cap * 3) // 4


def prepare_params(params, *, compute_dtype=jnp.bfloat16, eps=1e-5):
    """One-time weight preparation. Call once and reuse across encoder_forward calls.

    Folds eval-mode BatchNorm (running stats) into fc1/fc2, fuses the mu/std heads
    into a single lane-dense (N2p, 128) weight, pads hidden dims to multiples of
    128, casts the matmul operands to `compute_dtype`, and chooses the fc1
    K-tiling from the VMEM budget (w1 stays fully resident whenever it fits)."""
    Cin, N1 = params["w1"].shape
    N2 = params["w2"].shape[1]

    # ---- fold BatchNorm (eval mode, running stats) into fc weights/biases ----
    s1 = params["bn1_gamma"] * jax.lax.rsqrt(params["bn1_var"] + eps)
    t1 = params["bn1_beta"] - params["bn1_mean"] * s1
    s2 = params["bn2_gamma"] * jax.lax.rsqrt(params["bn2_var"] + eps)
    t2 = params["bn2_beta"] - params["bn2_mean"] * s2
    w1f = params["w1"] * s1[None, :]
    b1f = params["b1"] * s1 + t1
    w2f = params["w2"] * s2[None, :]
    b2f = params["b2"] * s2 + t2

    # ---- fuse mu/std heads ----
    wh = jnp.concatenate([params["w_mu"], params["w_std"]], axis=1)   # (N2, 2)
    bh = jnp.concatenate([params["b_mu"], params["b_std"]])           # (2,)

    N1p = _round_up(N1, 128)
    N2p = _round_up(N2, 128)
    isz = jnp.dtype(compute_dtype).itemsize
    budget = _vmem_budget_bytes()

    # ---- fc1 K-tiling choice: keep w1 resident whenever the working set fits ----
    tb_est = 256
    fixed = (2 * (N1p * N2p + N2p * _HEAD_WIDTH) * isz   # w2 + head weight (2 bufs)
             + 2 * tb_est * _HEAD_WIDTH * 4              # output blocks
             + tb_est * N1p * 4                          # f32 accumulator scratch
             + 8 * (N1p + N2p + _HEAD_WIDTH))            # biases
    resident = 2 * tb_est * Cin * 4 + 2 * Cin * N1p * isz   # f32 x tiles + w1
    if fixed + resident <= budget:
        kt, tk, Cinp = 1, Cin, Cin        # w1 resident; x streamed un-padded (f32)
    else:
        # Large-Cin fallback: 128-aligned K tiles (<=127 pad cols per group).
        # TODO(synk): optional fp8 w1 on v7x to halve the streamed weight bytes.
        target_tk = 2048
        kt = pl.cdiv(Cin, target_tk)
        tk = _round_up(pl.cdiv(Cin, kt), 128)
        Cinp = tk * kt

    def pad2(a, r, c, dt):
        return jnp.pad(a, ((0, r - a.shape[0]), (0, c - a.shape[1]))).astype(dt)

    return dict(
        w1=pad2(w1f, Cinp, N1p, compute_dtype),
        b1=pad2(b1f.reshape(1, N1), 1, N1p, jnp.float32),
        w2=pad2(w2f, N1p, N2p, compute_dtype),
        b2=pad2(b2f.reshape(1, N2), 1, N2p, jnp.float32),
        wh=pad2(wh, N2p, _HEAD_WIDTH, compute_dtype),
        bh=pad2(bh.reshape(1, 2), 1, _HEAD_WIDTH, jnp.float32),
        Cin=Cin, Cinp=Cinp, kt=kt, tk=tk, N1p=N1p, N2p=N2p,
        compute_dtype=compute_dtype, vmem_limit_bytes=int(budget),
    )


def _choose_tb(B, tb):
    if tb is not None:
        assert tb % 8 == 0
        return tb
    # ~256 rows per tile with minimal ragged waste, and >=2 batch tiles when B is
    # large enough so both v7x TensorCores get a tile (no-op on 1-TC v5e/v6e).
    bt_target = max(pl.cdiv(B, 256), 2 if B >= 16 else 1)
    return max(8, _round_up(pl.cdiv(B, bt_target), 8))


def encoder_forward(x, prep, *, pos_mean=True, tb=None):
    """Encoder forward on x of shape (B, Cin) using prepared params."""
    B, Cin = x.shape
    assert Cin == prep["Cin"], "prepare_params was built for a different Cin"
    kt, tk = prep["kt"], prep["tk"]
    Cinp, N1p, N2p = prep["Cinp"], prep["N1p"], prep["N2p"]

    tb = _choose_tb(B, tb)
    bt = pl.cdiv(B, tb)     # ragged last batch tile handled by Pallas (no padding)

    if kt == 1:
        xin = x                         # no prepass: f32, cast inside the kernel
        x_block = (tb, Cin)             # full-extent K block (legal for any Cin)
    else:
        # Large-Cin fallback: pad K once to Cinp and cast to the matmul dtype.
        xin = jnp.pad(x, ((0, 0), (0, Cinp - Cin))).astype(prep["compute_dtype"])
        x_block = (tb, tk)

    rep = lambda shape: pl.BlockSpec(shape, lambda i, k: (0, 0))   # resident params
    kernel = functools.partial(encoder_kernel, pos_mean=pos_mean)

    out = pl.pallas_call(
        kernel,
        out_shape=jax.ShapeDtypeStruct((B, _HEAD_WIDTH), jnp.float32),
        grid_spec=pltpu.PrefetchScalarGridSpec(
            num_scalar_prefetch=0,
            grid=(bt, kt),                                     # reduction axis last
            in_specs=[
                pl.BlockSpec(x_block, lambda i, k: (i, k)),    # x tile
                pl.BlockSpec((tk, N1p), lambda i, k: (k, 0)),  # w1 (resident if kt==1)
                rep((1, N1p)),                                 # b1 (BN1 folded)
                rep((N1p, N2p)),                               # w2 (BN2 folded)
                rep((1, N2p)),                                 # b2
                rep((N2p, _HEAD_WIDTH)),                       # fused head weight
                rep((1, _HEAD_WIDTH)),                         # fused head bias
            ],
            out_specs=pl.BlockSpec((tb, _HEAD_WIDTH), lambda i, k: (i, 0)),
            scratch_shapes=[pltpu.VMEM((tb, N1p), jnp.float32)],
        ),
        compiler_params=pltpu.CompilerParams(
            dimension_semantics=("parallel", "arbitrary"),
            vmem_limit_bytes=int(prep["vmem_limit_bytes"])),
    )(xin, prep["w1"], prep["b1"], prep["w2"], prep["b2"], prep["wh"], prep["bh"])

    mu = out[:, 0:1]
    std = out[:, 1:2]
    return mu, std


def init_params(key, Cin, N1=500, N2=250):
    """Deterministic init matching Encoder.init_weights (xavier_uniform weights,
    zero bias, BN weight=1 / bias=0 / running_mean=0 / running_var=1)."""
    def xavier(key, fan_in, fan_out):
        bound = math.sqrt(6.0 / (fan_in + fan_out))
        # stored as (in, out) so the kernel computes x @ W
        return jax.random.uniform(key, (fan_in, fan_out), jnp.float32, -bound, bound)

    k1, k2, k3, k4 = jax.random.split(key, 4)
    return dict(
        w1=xavier(k1, Cin, N1), b1=jnp.zeros((N1,), jnp.float32),
        bn1_gamma=jnp.ones((N1,), jnp.float32), bn1_beta=jnp.zeros((N1,), jnp.float32),
        bn1_mean=jnp.zeros((N1,), jnp.float32), bn1_var=jnp.ones((N1,), jnp.float32),
        w2=xavier(k2, N1, N2), b2=jnp.zeros((N2,), jnp.float32),
        bn2_gamma=jnp.ones((N2,), jnp.float32), bn2_beta=jnp.zeros((N2,), jnp.float32),
        bn2_mean=jnp.zeros((N2,), jnp.float32), bn2_var=jnp.ones((N2,), jnp.float32),
        w_mu=xavier(k3, N2, 1), b_mu=jnp.zeros((1,), jnp.float32),
        w_std=xavier(k4, N2, 1), b_std=jnp.zeros((1,), jnp.float32),
    )


def _reference(x, params, pos_mean=True):
    eps = 1e-5
    s1 = params["bn1_gamma"] / jnp.sqrt(params["bn1_var"] + eps)
    t1 = params["bn1_beta"] - params["bn1_mean"] * s1
    s2 = params["bn2_gamma"] / jnp.sqrt(params["bn2_var"] + eps)
    t2 = params["bn2_beta"] - params["bn2_mean"] * s2
    h1 = jax.nn.leaky_relu((x @ params["w1"] + params["b1"]) * s1 + t1, 0.01)
    h2 = jax.nn.leaky_relu((h1 @ params["w2"] + params["b2"]) * s2 + t2, 0.01)
    mu = h2 @ params["w_mu"] + params["b_mu"]
    st = jax.nn.softplus(h2 @ params["w_std"] + params["b_std"])
    if pos_mean:
        mu = jax.nn.softplus(mu)
    return mu, st


if __name__ == "__main__":
    B, Cin, N1, N2 = 8, 32, 500, 250   # small Cin; N1/N2 are the module defaults

    key = jax.random.PRNGKey(0)
    kx, kp = jax.random.split(key)
    x = jax.random.normal(kx, (B, Cin), jnp.float32)
    params = init_params(kp, Cin, N1, N2)

    mu_ref, std_ref = _reference(x, params, pos_mean=True)

    # f32 matmul operands: tight check against the pure-JAX reference.
    prep32 = prepare_params(params, compute_dtype=jnp.float32)
    mu32, std32 = encoder_forward(x, prep32, pos_mean=True)
    jax.block_until_ready((mu32, std32))
    assert mu32.shape == (B, 1) and std32.shape == (B, 1)
    assert jnp.allclose(mu32, mu_ref, atol=1e-4, rtol=1e-4)
    assert jnp.allclose(std32, std_ref, atol=1e-4, rtol=1e-4)

    # pos_mean=False path (raw mu, softplus std).
    muf_ref, stdf_ref = _reference(x, params, pos_mean=False)
    muf, stdf = encoder_forward(x, prep32, pos_mean=False)
    jax.block_until_ready((muf, stdf))
    assert jnp.allclose(muf, muf_ref, atol=1e-4, rtol=1e-4)
    assert jnp.allclose(stdf, stdf_ref, atol=1e-4, rtol=1e-4)

    # Default bf16 matmul operands (f32 accumulate + f32 epilogue): looser check.
    prep_bf = prepare_params(params)   # one-time prep, reuse across calls
    mu_bf, std_bf = encoder_forward(x, prep_bf, pos_mean=True)
    jax.block_until_ready((mu_bf, std_bf))
    assert mu_bf.shape == (B, 1) and std_bf.shape == (B, 1)
    assert jnp.allclose(mu_bf, mu_ref, atol=3e-2, rtol=3e-2)
    assert jnp.allclose(std_bf, std_ref, atol=3e-2, rtol=3e-2)

    print("KERNEL_OK")
</pallas_src>

<mosaic_0001>
module attributes {stable_mosaic.version = 11 : i64} {
  func.func @encoder_kernel(%arg0: i32, %arg1: i32, %arg2: memref<8x32xf32, #tpu.memory_space<vmem>>, %arg3: memref<32x512xf32, #tpu.memory_space<vmem>>, %arg4: memref<1x512xf32, #tpu.memory_space<vmem>>, %arg5: memref<512x256xf32, #tpu.memory_space<vmem>>, %arg6: memref<1x256xf32, #tpu.memory_space<vmem>>, %arg7: memref<256x128xf32, #tpu.memory_space<vmem>>, %arg8: memref<1x128xf32, #tpu.memory_space<vmem>>, %arg9: memref<8x128xf32, #tpu.memory_space<vmem>>, %arg10: memref<8x512xf32, #tpu.memory_space<vmem>>) attributes {dimension_semantics = [#tpu.dimension_semantics<parallel>, #tpu.dimension_semantics<arbitrary>], iteration_bounds = array<i64: 1, 1>, scalar_prefetch = 0 : i64, scratch_operands = 1 : i64, tpu.core_type = #tpu.core_type<tc>, window_params = [{transform_indices = @transform_0, window_bounds = array<i64: 8, 32>}, {transform_indices = @transform_1, window_bounds = array<i64: 32, 512>}, {pipeline_mode = #tpu.pipeline_mode<synchronous>, transform_indices = @transform_2, window_bounds = array<i64: 1, 512>}, {pipeline_mode = #tpu.pipeline_mode<synchronous>, transform_indices = @transform_3, window_bounds = array<i64: 512, 256>}, {pipeline_mode = #tpu.pipeline_mode<synchronous>, transform_indices = @transform_4, window_bounds = array<i64: 1, 256>}, {pipeline_mode = #tpu.pipeline_mode<synchronous>, transform_indices = @transform_5, window_bounds = array<i64: 256, 128>}, {pipeline_mode = #tpu.pipeline_mode<synchronous>, transform_indices = @transform_6, window_bounds = array<i64: 1, 128>}, {transform_indices = @transform_7, window_bounds = array<i64: 8, 128>}]} {
    %c0_i32 = arith.constant 0 : i32
    %0 = arith.cmpi eq, %arg1, %c0_i32 : i32
    %1 = arith.extui %0 : i1 to i32
    %c0_i32_0 = arith.constant 0 : i32
    %2 = arith.cmpi ne, %1, %c0_i32_0 : i32
    scf.if %2 {
      %cst_10 = arith.constant 0.000000e+00 : f32
      %12 = vector.broadcast %cst_10 : f32 to vector<8x512xf32>
      %c0_11 = arith.constant 0 : index
      %c0_12 = arith.constant 0 : index
      %13 = vector.load %arg10[%c0_11, %c0_12] : memref<8x512xf32, #tpu.memory_space<vmem>>, vector<8x512xf32>
      tpu.vector_store %arg10[%c0_11, %c0_12], %12 {strides = array<i32>} : memref<8x512xf32, #tpu.memory_space<vmem>>, vector<8x512xf32>,
    } else {
    }
    %c0 = arith.constant 0 : index
    %c0_1 = arith.constant 0 : index
    %3 = vector.load %arg10[%c0, %c0_1] : memref<8x512xf32, #tpu.memory_space<vmem>>, vector<8x512xf32>
    %c0_2 = arith.constant 0 : index
    %c0_3 = arith.constant 0 : index
    %4 = vector.load %arg2[%c0_2, %c0_3] : memref<8x32xf32, #tpu.memory_space<vmem>>, vector<8x32xf32>
    %c0_4 = arith.constant 0 : index
    %c0_5 = arith.constant 0 : index
    %5 = vector.load %arg3[%c0_4, %c0_5] : memref<32x512xf32, #tpu.memory_space<vmem>>, vector<32x512xf32>
    %cst = arith.constant dense<0.000000e+00> : vector<8x512xf32>
    %6 = tpu.matmul %4, %5, %cst {dimension_numbers = #tpu.dot_dimension_numbers<[1], [0], [0], [1], [0, 0, 1, 1], [], []>} : vector<8x32xf32>, vector<32x512xf32>, vector<8x512xf32> -> vector<8x512xf32>
    %7 = arith.addf %3, %6 : vector<8x512xf32>
    %c0_6 = arith.constant 0 : index
    %c0_7 = arith.constant 0 : index
    %8 = vector.load %arg10[%c0_6, %c0_7] : memref<8x512xf32, #tpu.memory_space<vmem>>, vector<8x512xf32>
    tpu.vector_store %arg10[%c0_6, %c0_7], %7 {strides = array<i32>} : memref<8x512xf32, #tpu.memory_space<vmem>>, vector<8x512xf32>,
    %c0_i32_8 = arith.constant 0 : i32
    %9 = arith.cmpi eq, %arg1, %c0_i32_8 : i32
    %10 = arith.extui %9 : i1 to i32
    %c0_i32_9 = arith.constant 0 : i32
    %11 = arith.cmpi ne, %10, %c0_i32_9 : i32
    scf.if %11 {
      %c0_10 = arith.constant 0 : index
      %c0_11 = arith.constant 0 : index
      %12 = vector.load %arg10[%c0_10, %c0_11] : memref<8x512xf32, #tpu.memory_space<vmem>>, vector<8x512xf32>
      %c0_12 = arith.constant 0 : index
      %c0_13 = arith.constant 0 : index
      %13 = vector.load %arg4[%c0_12, %c0_13] : memref<1x512xf32, #tpu.memory_space<vmem>>, vector<1x512xf32>
      %14 = vector.broadcast %13 : vector<1x512xf32> to vector<8x512xf32>
      %15 = arith.addf %12, %14 : vector<8x512xf32>
      %cst_14 = arith.constant 0.000000e+00 : f32
      %16 = vector.broadcast %cst_14 : f32 to vector<8x512xf32>
      %17 = arith.cmpf ogt, %15, %16 : vector<8x512xf32>
      %cst_15 = arith.constant 0.00999999977 : f32
      %18 = vector.broadcast %cst_15 : f32 to vector<8x512xf32>
      %19 = arith.mulf %18, %15 : vector<8x512xf32>
      %20 = arith.select %17, %15, %19 : vector<8x512xi1>, vector<8x512xf32>
      %c0_16 = arith.constant 0 : index
      %c0_17 = arith.constant 0 : index
      %21 = vector.load %arg5[%c0_16, %c0_17] : memref<512x256xf32, #tpu.memory_space<vmem>>, vector<512x256xf32>
      %cst_18 = arith.constant dense<0.000000e+00> : vector<8x256xf32>
      %22 = tpu.matmul %20, %21, %cst_18 {dimension_numbers = #tpu.dot_dimension_numbers<[1], [0], [0], [1], [0, 0, 1, 1], [], []>} : vector<8x512xf32>, vector<512x256xf32>, vector<8x256xf32> -> vector<8x256xf32>
      %c0_19 = arith.constant 0 : index
      %c0_20 = arith.constant 0 : index
      %23 = vector.load %arg6[%c0_19, %c0_20] : memref<1x256xf32, #tpu.memory_space<vmem>>, vector<1x256xf32>
      %24 = vector.broadcast %23 : vector<1x256xf32> to vector<8x256xf32>
      %25 = arith.addf %22, %24 : vector<8x256xf32>
      %cst_21 = arith.constant 0.000000e+00 : f32
      %26 = vector.broadcast %cst_21 : f32 to vector<8x256xf32>
      %27 = arith.cmpf ogt, %25, %26 : vector<8x256xf32>
      %cst_22 = arith.constant 0.00999999977 : f32
      %28 = vector.broadcast %cst_22 : f32 to vector<8x256xf32>
      %29 = arith.mulf %28, %25 : vector<8x256xf32>
      %30 = arith.select %27, %25, %29 : vector<8x256xi1>, vector<8x256xf32>
      %c0_23 = arith.constant 0 : index
      %c0_24 = arith.constant 0 : index
      %31 = vector.load %arg7[%c0_23, %c0_24] : memref<256x128xf32, #tpu.memory_space<vmem>>, vector<256x128xf32>
      %cst_25 = arith.constant dense<0.000000e+00> : vector<8x128xf32>
      %32 = tpu.matmul %30, %31, %cst_25 {dimension_numbers = #tpu.dot_dimension_numbers<[1], [0], [0], [1], [0, 0, 1, 1], [], []>} : vector<8x256xf32>, vector<256x128xf32>, vector<8x128xf32> -> vector<8x128xf32>
      %c0_26 = arith.constant 0 : index
      %c0_27 = arith.constant 0 : index
      %33 = vector.load %arg8[%c0_26, %c0_27] : memref<1x128xf32, #tpu.memory_space<vmem>>, vector<1x128xf32>
      %34 = vector.broadcast %33 : vector<1x128xf32> to vector<8x128xf32>
      %35 = arith.addf %32, %34 : vector<8x128xf32>
      %cst_28 = arith.constant 0.000000e+00 : f32
      %36 = vector.broadcast %cst_28 : f32 to vector<8x128xf32>
      %37 = arith.maximumf %35, %36 : vector<8x128xf32>
      %38 = math.absf %35 : vector<8x128xf32>
      %cst_29 = arith.constant 0.000000e+00 : f32
      %39 = vector.broadcast %cst_29 : f32 to vector<8x128xf32>
      %40 = arith.subf %39, %38 : vector<8x128xf32>
      %41 = math.exp %40 : vector<8x128xf32>
      %42 = math.log1p %41 : vector<8x128xf32>
      %43 = arith.addf %37, %42 : vector<8x128xf32>
      %c0_30 = arith.constant 0 : index
      %c0_31 = arith.constant 0 : index
      %44 = vector.load %arg9[%c0_30, %c0_31] : memref<8x128xf32, #tpu.memory_space<vmem>>, vector<8x128xf32>
      tpu.vector_store %arg9[%c0_30, %c0_31], %43 {strides = array<i32>} : memref<8x128xf32, #tpu.memory_space<vmem>>, vector<8x128xf32>,
    } else {
    }
    return
  }
  func.func @transform_0(%arg0: i32, %arg1: i32) -> (i32, i32) {
    %c0_i32 = arith.constant 0 : i32
    return %arg0, %arg1 : i32, i32
  }
  func.func @transform_1(%arg0: i32, %arg1: i32) -> (i32, i32) {
    %c0_i32 = arith.constant 0 : i32
    %c0_i32_0 = arith.constant 0 : i32
    return %arg1, %c0_i32 : i32, i32
  }
  func.func @transform_2(%arg0: i32, %arg1: i32) -> (i32, i32) {
    %c0_i32 = arith.constant 0 : i32
    %c0_i32_0 = arith.constant 0 : i32
    %c0_i32_1 = arith.constant 0 : i32
    return %c0_i32, %c0_i32_0 : i32, i32
  }
  func.func @transform_3(%arg0: i32, %arg1: i32) -> (i32, i32) {
    %c0_i32 = arith.constant 0 : i32
    %c0_i32_0 = arith.constant 0 : i32
    %c0_i32_1 = arith.constant 0 : i32
    return %c0_i32, %c0_i32_0 : i32, i32
  }
  func.func @transform_4(%arg0: i32, %arg1: i32) -> (i32, i32) {
    %c0_i32 = arith.constant 0 : i32
    %c0_i32_0 = arith.constant 0 : i32
    %c0_i32_1 = arith.constant 0 : i32
    return %c0_i32, %c0_i32_0 : i32, i32
  }
  func.func @transform_5(%arg0: i32, %arg1: i32) -> (i32, i32) {
    %c0_i32 = arith.constant 0 : i32
    %c0_i32_0 = arith.constant 0 : i32
    %c0_i32_1 = arith.constant 0 : i32
    return %c0_i32, %c0_i32_0 : i32, i32
  }
  func.func @transform_6(%arg0: i32, %arg1: i32) -> (i32, i32) {
    %c0_i32 = arith.constant 0 : i32
    %c0_i32_0 = arith.constant 0 : i32
    %c0_i32_1 = arith.constant 0 : i32
    return %c0_i32, %c0_i32_0 : i32, i32
  }
  func.func @transform_7(%arg0: i32, %arg1: i32) -> (i32, i32) {
    %c0_i32 = arith.constant 0 : i32
    %c0_i32_0 = arith.constant 0 : i32
    return %arg0, %c0_i32 : i32, i32
  }
}

</mosaic_0001>

<llo_original>
// kernel: tpu_custom_call.1
$region0: #{tpu_custom_call.1}
  #allocation0 [shape = 'u32[]', space=smem, size = 0x4, offset = 0x4, fixed_abs, tag = 'smem constant byte address 0x4 - core index']
  #allocation1 [shape = 'u32[72,128]{1,0:T(1,128)}', space=vmem, size = 0x9000, scoped, tag = 'internal scratch']
  #allocation2 [shape = 'f32[8,512]{1,0:T(8,128)}', space=vmem, size = 0x4000, scoped, tag = 'scratch operand']
  %s0 = inlined_call_operand.hbm [shape: f32[8,32], index: 0, kind: input, shape index: {}]
  %s1 = inlined_call_operand.hbm [shape: f32[32,512], index: 1, kind: input, shape index: {}]
  %s2 = inlined_call_operand.hbm [shape: f32[1,512], index: 2, kind: input, shape index: {}]
  %s3 = inlined_call_operand.hbm [shape: f32[512,256], index: 3, kind: input, shape index: {}]
  %s4 = inlined_call_operand.vmem [shape: f32[1,256], index: 4, kind: input, shape index: {}]
  %s5 = inlined_call_operand.hbm [shape: f32[256,128], index: 5, kind: input, shape index: {}]
  %s6 = inlined_call_operand.vmem [shape: f32[1,128], index: 6, kind: input, shape index: {}]
  %s7 = inlined_call_operand.hbm [shape: f32[8,128], index: 7, kind: output, shape index: {}]
  %s8 = sld [smem:[#allocation0]]
  $region66: #{tpu_custom_call.1} parent=0
    _
  %s10 = ssub.s32 1, %s8
  %s11 = scalar_select 0, %s10, %s8
  $region1: #{tpu_custom_call.1} parent=0
    #allocation3 [shape = 'u8[4096]{0}', space=vmem, size = 0x1000, scoped, tag = 'input window, operand 0, single buffered']
    #allocation4 [shape = 's32[1]{0}', space=sflag, size = 0x4, scoped, tag = 'scoped memory for tpu_custom_call.1']
    #allocation5 [shape = 's32[1]{0}', space=sflag, size = 0x4, scoped, tag = 'scoped memory for tpu_custom_call.1']
    #allocation6 [shape = 'u8[65536]{0}', space=vmem, size = 0x10000, scoped, tag = 'input window, operand 1, single buffered']
    #allocation7 [shape = 's32[1]{0}', space=sflag, size = 0x4, scoped, tag = 'scoped memory for tpu_custom_call.1']
    #allocation8 [shape = 'u8[2048]{0}', space=vmem, size = 0x800, scoped, tag = 'input window, operand 2, single buffered']
    #allocation9 [shape = 'u8[524288]{0}', space=vmem, size = 0x80000, scoped, tag = 'input window, operand 3, single buffered']
    #allocation10 [shape = 's32[1]{0}', space=sflag, size = 0x4, scoped, tag = 'scoped memory for tpu_custom_call.1']
    #allocation11 [shape = 'u8[131072]{0}', space=vmem, size = 0x20000, scoped, tag = 'input window, operand 5, single buffered']
    #allocation12 [shape = 'u8[4096]{0}', space=vmem, size = 0x1000, scoped, tag = 'output window, operand 0, single buffered']
    %12 = vsyncpa [#allocation4], 0
    %13 = vsyncpa [#allocation7], 0
    %14 = vsyncpa [#allocation10], 0
    %15 = vsyncpa [#allocation5], 0
    // Predicated region
    $region2: #{tpu_custom_call.1} parent=1 // pred_check
      _
    $region3: #{tpu_custom_call.1} parent=1 // pred_check_branch
      %17 = sbr.rel (0) target = $region5
    $region4: #{tpu_custom_call.1} parent=1 // pred_region
      %19 = vsyncadd [#allocation4], 0
      %s21 = sshll.u32 %s0, 4
      %s22 = int_to_ptr.hbm [resolvable:$true] %s21
      %s23 = sshll.u32 [#allocation3], 4
      %s24 = int_to_ptr.vmem [resolvable:$true] %s23
      %26 = dma.hbm_to_vmem [thread:$0]  %s22, 128, %s24, [#allocation4]
    $region5: #{tpu_custom_call.1} parent=1 // pred_fallthru
      _
    // Predicated region
    $region6: #{tpu_custom_call.1} parent=1 // pred_check
      _
    $region7: #{tpu_custom_call.1} parent=1 // pred_check_branch
      %28 = sbr.rel (0) target = $region9
    $region8: #{tpu_custom_call.1} parent=1 // pred_region
      %30 = vsyncadd [#allocation7], 0
      %s31 = sshll.u32 %s1, 4
      %s32 = int_to_ptr.hbm [resolvable:$true] %s31
      %s33 = sshll.u32 [#allocation6], 4
      %s34 = int_to_ptr.vmem [resolvable:$true] %s33
      %39 = dma.hbm_to_vmem [thread:$0]  %s32, 2048, %s34, [#allocation7], 512, 512, 32
    $region9: #{tpu_custom_call.1} parent=1 // pred_fallthru
      _
    // Predicated region
    $region10: #{tpu_custom_call.1} parent=1 // pred_check
      _
    $region11: #{tpu_custom_call.1} parent=1 // pred_check_branch
      %41 = sbr.rel (0) target = $region13
    $region12: #{tpu_custom_call.1} parent=1 // pred_region
      %43 = vsyncadd [#allocation7], 0
      %s45 = sshll.u32 %s2, 4
      %s46 = int_to_ptr.hbm [resolvable:$true] %s45
      %s47 = sshll.u32 [#allocation8], 4
      %s48 = int_to_ptr.vmem [resolvable:$true] %s47
      %50 = dma.hbm_to_vmem [thread:$0]  %s46, 64, %s48, [#allocation7]
    $region13: #{tpu_custom_call.1} parent=1 // pred_fallthru
      _
    // Predicated region
    $region14: #{tpu_custom_call.1} parent=1 // pred_check
      _
    $region15: #{tpu_custom_call.1} parent=1 // pred_check_branch
      %52 = sbr.rel (0) target = $region17
    $region16: #{tpu_custom_call.1} parent=1 // pred_region
      %54 = vsyncadd [#allocation10], 0
      %s55 = sshll.u32 %s3, 4
      %s56 = int_to_ptr.hbm [resolvable:$true] %s55
      %s57 = sshll.u32 [#allocation9], 4
      %s58 = int_to_ptr.vmem [resolvable:$true] %s57
      %63 = dma.hbm_to_vmem [thread:$0]  %s56, 16384, %s58, [#allocation10], 256, 256, 16
    $region17: #{tpu_custom_call.1} parent=1 // pred_fallthru
      _
    // Predicated region
    $region18: #{tpu_custom_call.1} parent=1 // pred_check
      _
    $region19: #{tpu_custom_call.1} parent=1 // pred_check_branch
      %65 = sbr.rel (0) target = $region21
    $region20: #{tpu_custom_call.1} parent=1 // pred_region
      _
    $region21: #{tpu_custom_call.1} parent=1 // pred_fallthru
      _
    // Predicated region
    $region22: #{tpu_custom_call.1} parent=1 // pred_check
      _
    $region23: #{tpu_custom_call.1} parent=1 // pred_check_branch
      %67 = sbr.rel (0) target = $region25
    $region24: #{tpu_custom_call.1} parent=1 // pred_region
      %69 = vsyncadd [#allocation10], 0
      %s70 = sshll.u32 %s5, 4
      %s71 = int_to_ptr.hbm [resolvable:$true] %s70
      %s72 = sshll.u32 [#allocation11], 4
      %s73 = int_to_ptr.vmem [resolvable:$true] %s72
      %78 = dma.hbm_to_vmem [thread:$0]  %s71, 4096, %s73, [#allocation10], 128, 128, 8
    $region25: #{tpu_custom_call.1} parent=1 // pred_fallthru
      _
    // Predicated region
    $region26: #{tpu_custom_call.1} parent=1 // pred_check
      _
    $region27: #{tpu_custom_call.1} parent=1 // pred_check_branch
      %80 = sbr.rel (0) target = $region29
    $region28: #{tpu_custom_call.1} parent=1 // pred_region
      _
    $region29: #{tpu_custom_call.1} parent=1 // pred_fallthru
      _
    // Predicated region
    $region30: #{tpu_custom_call.1} parent=1 // pred_check
      _
    $region31: #{tpu_custom_call.1} parent=1 // pred_check_branch
      %82 = sbr.rel (0) target = $region33
    $region32: #{tpu_custom_call.1} parent=1 // pred_region
      %84 = dma.done [#allocation4], 128
    $region33: #{tpu_custom_call.1} parent=1 // pred_fallthru
      _
    // Predicated region
    $region34: #{tpu_custom_call.1} parent=1 // pred_check
      _
    $region35: #{tpu_custom_call.1} parent=1 // pred_check_branch
      %86 = sbr.rel (0) target = $region37
    $region36: #{tpu_custom_call.1} parent=1 // pred_region
      %88 = dma.done [#allocation7], 2048
    $region37: #{tpu_custom_call.1} parent=1 // pred_fallthru
      _
    // Predicated region
    $region38: #{tpu_custom_call.1} parent=1 // pred_check
      _
    $region39: #{tpu_custom_call.1} parent=1 // pred_check_branch
      %90 = sbr.rel (0) target = $region41
    $region40: #{tpu_custom_call.1} parent=1 // pred_region
      %92 = dma.done [#allocation7], 64
    $region41: #{tpu_custom_call.1} parent=1 // pred_fallthru
      _
    // Predicated region
    $region42: #{tpu_custom_call.1} parent=1 // pred_check
      _
    $region43: #{tpu_custom_call.1} parent=1 // pred_check_branch
      %94 = sbr.rel (0) target = $region45
    $region44: #{tpu_custom_call.1} parent=1 // pred_region
      %96 = dma.done [#allocation10], 16384
    $region45: #{tpu_custom_call.1} parent=1 // pred_fallthru
      _
    // Predicated region
    $region46: #{tpu_custom_call.1} parent=1 // pred_check
      _
    $region47: #{tpu_custom_call.1} parent=1 // pred_check_branch
      %98 = sbr.rel (0) target = $region49
    $region48: #{tpu_custom_call.1} parent=1 // pred_region
      %100 = dma.done [#allocation10], 4096
    $region49: #{tpu_custom_call.1} parent=1 // pred_fallthru
      _
    %p101 = scmp.eq.s32.totalorder 0, 0
    // Predicated region
    $region50: #{tpu_custom_call.1} parent=1 // pred_check
      %p102 = pneg %p101
    $region51: #{tpu_custom_call.1} parent=1 // pred_check_branch
      %104 = sbr.rel (%p102) target = $region53
    $region52: #{tpu_custom_call.1} parent=1 // pred_region
      %105 = vst [vmem:[#allocation2] sm:$0xff] 0.0
      %106 = vst [vmem:[#allocation2 + $0x8] sm:$0xff] 0.0
      %107 = vst [vmem:[#allocation2 + $0x10] sm:$0xff] 0.0
      %108 = vst [vmem:[#allocation2 + $0x18] sm:$0xff] 0.0
    $region53: #{tpu_custom_call.1} parent=1 // pred_fallthru
      _
    %v109 = vld [vmem:[#allocation2] sm:$0xff]
    %v110 = vld [vmem:[#allocation2 + $0x8] sm:$0xff]
    %v111 = vld [vmem:[#allocation2 + $0x10] sm:$0xff]
    %v112 = vld [vmem:[#allocation2 + $0x18] sm:$0xff]
    %v113 = vld [vmem:[#allocation3] sm:$0xff]
    %v114 = vld [vmem:[#allocation6] sm:$0xff]
    %v115 = vld [vmem:[#allocation6 + $0x8] sm:$0xff]
    %v116 = vld [vmem:[#allocation6 + $0x10] sm:$0xff]
    %v117 = vld [vmem:[#allocation6 + $0x18] sm:$0xff]
    %v118 = vld [vmem:[#allocation6 + $0x20] sm:$0xff]
    %v119 = vld [vmem:[#allocation6 + $0x28] sm:$0xff]
    %v120 = vld [vmem:[#allocation6 + $0x30] sm:$0xff]
    %v121 = vld [vmem:[#allocation6 + $0x38] sm:$0xff]
    %v122 = vld [vmem:[#allocation6 + $0x40] sm:$0xff]
    %v123 = vld [vmem:[#allocation6 + $0x48] sm:$0xff]
    %v124 = vld [vmem:[#allocation6 + $0x50] sm:$0xff]
    %v125 = vld [vmem:[#allocation6 + $0x58] sm:$0xff]
    %v126 = vld [vmem:[#allocation6 + $0x60] sm:$0xff]
    %v127 = vld [vmem:[#allocation6 + $0x68] sm:$0xff]
    %v128 = vld [vmem:[#allocation6 + $0x70] sm:$0xff]
    %v129 = vld [vmem:[#allocation6 + $0x78] sm:$0xff]
    %vm130 = vcmask 261120
    %v132 = vsel %vm130, %v113, 0
    %134 = vmatpush.msra.mxu0 0.0
    %135 = vmatpush.msra.mxu0 0.0
    %136 = vmatpush.msra.mxu0 0.0
    %137 = vmatpush.msra.mxu0 0.0
    %138 = vmatpush.msra.mxu0 0.0
    %139 = vmatpush.msra.mxu0 0.0
    %140 = vmatpush.msra.mxu0 0.0
    %141 = vmatpush.msra.mxu0 0.0
    %142 = vmatpush.msra.mxu0 0.0
    %143 = vmatpush.msra.mxu0 0.0
    %144 = vmatpush.msra.mxu0 0.0
    %145 = vmatpush.msra.mxu0 0.0
    %146 = vmatpush.msra.mxu0 %v126
    %147 = vmatpush.msra.mxu0 %v122
    %148 = vmatpush.msra.mxu0 %v118
    %149 = vmatpush.msra.mxu0 %v114
    %150 = vmatmul.f32.gmra.mxu0 %v132
    %v151 = vpop.f32.mrf.mxu0
    %v152 = vadd.f32 0.0, %v151
    %153 = vdwg.mxu0
    %154 = vmatpush.msra.mxu0 0.0
    %155 = vmatpush.msra.mxu0 0.0
    %156 = vmatpush.msra.mxu0 0.0
    %157 = vmatpush.msra.mxu0 0.0
    %158 = vmatpush.msra.mxu0 0.0
    %159 = vmatpush.msra.mxu0 0.0
    %160 = vmatpush.msra.mxu0 0.0
    %161 = vmatpush.msra.mxu0 0.0
    %162 = vmatpush.msra.mxu0 0.0
    %163 = vmatpush.msra.mxu0 0.0
    %164 = vmatpush.msra.mxu0 0.0
    %165 = vmatpush.msra.mxu0 0.0
    %166 = vmatpush.msra.mxu0 %v127
    %167 = vmatpush.msra.mxu0 %v123
    %168 = vmatpush.msra.mxu0 %v119
    %169 = vmatpush.msra.mxu0 %v115
    %170 = vmatmul.f32.gmra.mxu0 %v132
    %v171 = vpop.f32.mrf.mxu0
    %v172 = vadd.f32 0.0, %v171
    %173 = vdwg.mxu0
    %174 = vmatpush.msra.mxu0 0.0
    %175 = vmatpush.msra.mxu0 0.0
    %176 = vmatpush.msra.mxu0 0.0
    %177 = vmatpush.msra.mxu0 0.0
    %178 = vmatpush.msra.mxu0 0.0
    %179 = vmatpush.msra.mxu0 0.0
    %180 = vmatpush.msra.mxu0 0.0
    %181 = vmatpush.msra.mxu0 0.0
    %182 = vmatpush.msra.mxu0 0.0
    %183 = vmatpush.msra.mxu0 0.0
    %184 = vmatpush.msra.mxu0 0.0
    %185 = vmatpush.msra.mxu0 0.0
    %186 = vmatpush.msra.mxu0 %v128
    %187 = vmatpush.msra.mxu0 %v124
    %188 = vmatpush.msra.mxu0 %v120
    %189 = vmatpush.msra.mxu0 %v116
    %190 = vmatmul.f32.gmra.mxu0 %v132
    %v191 = vpop.f32.mrf.mxu0
    %v192 = vadd.f32 0.0, %v191
    %193 = vdwg.mxu0
    %194 = vmatpush.msra.mxu0 0.0
    %195 = vmatpush.msra.mxu0 0.0
    %196 = vmatpush.msra.mxu0 0.0
    %197 = vmatpush.msra.mxu0 0.0
    %198 = vmatpush.msra.mxu0 0.0
    %199 = vmatpush.msra.mxu0 0.0
    %200 = vmatpush.msra.mxu0 0.0
    %201 = vmatpush.msra.mxu0 0.0
    %202 = vmatpush.msra.mxu0 0.0
    %203 = vmatpush.msra.mxu0 0.0
    %204 = vmatpush.msra.mxu0 0.0
    %205 = vmatpush.msra.mxu0 0.0
    %206 = vmatpush.msra.mxu0 %v129
    %207 = vmatpush.msra.mxu0 %v125
    %208 = vmatpush.msra.mxu0 %v121
    %209 = vmatpush.msra.mxu0 %v117
    %210 = vmatmul.f32.gmra.mxu0 %v132
    %v211 = vpop.f32.mrf.mxu0
    %v212 = vadd.f32 0.0, %v211
    %213 = vdwg.mxu0
    %v214 = vadd.f32 %v109, %v152
    %v215 = vadd.f32 %v110, %v172
    %v216 = vadd.f32 %v111, %v192
    %v217 = vadd.f32 %v112, %v212
    %218 = vst [vmem:[#allocation2] sm:$0xff] %v214
    %219 = vst [vmem:[#allocation2 + $0x8] sm:$0xff] %v215
    %220 = vst [vmem:[#allocation2 + $0x10] sm:$0xff] %v216
    %221 = vst [vmem:[#allocation2 + $0x18] sm:$0xff] %v217
    // Predicated region
    $region54: #{tpu_custom_call.1} parent=1 // pred_check
      %p222 = pneg %p101
    $region55: #{tpu_custom_call.1} parent=1 // pred_check_branch
      %224 = sbr.rel (%p222) target = $region57
    $region56: #{tpu_custom_call.1} parent=1 // pred_region
      %v225 = vld [vmem:[#allocation2] sm:$0xff]
      %v226 = vld [vmem:[#allocation2 + $0x8] sm:$0xff]
      %v227 = vld [vmem:[#allocation2 + $0x10] sm:$0xff]
      %v228 = vld [vmem:[#allocation2 + $0x18] sm:$0xff]
      %v229 = vld [vmem:[#allocation8] sm:$0xf]
      %v231 = vperm.slane %v229, 0
      %v232 = vperm.slane %v229, 1
      %v233 = vperm.slane %v229, 2
      %v234 = vperm.slane %v229, 3
      %v239 = vadd.f32 %v225, %v231
      %v240 = vadd.f32 %v226, %v232
      %v241 = vadd.f32 %v227, %v233
      %v242 = vadd.f32 %v228, %v234
      %vm243 = vcmp.gt.f32.partialorder %v239, 0.0
      %vm244 = vcmp.gt.f32.partialorder %v240, 0.0
      %vm245 = vcmp.gt.f32.partialorder %v241, 0.0
      %vm246 = vcmp.gt.f32.partialorder %v242, 0.0
      %v247 = vmul.f32 %v239, 0.01
      %v248 = vmul.f32 %v240, 0.01
      %v249 = vmul.f32 %v241, 0.01
      %v250 = vmul.f32 %v242, 0.01
      %v251 = vsel %vm243, %v239, %v247
      %v252 = vsel %vm244, %v240, %v248
      %v253 = vsel %vm245, %v241, %v249
      %v254 = vsel %vm246, %v242, %v250
      %v255 = vld [vmem:[#allocation9] sm:$0xff]
      %v256 = vld [vmem:[#allocation9 + $0x8] sm:$0xff]
      %v257 = vld [vmem:[#allocation9 + $0x10] sm:$0xff]
      %v258 = vld [vmem:[#allocation9 + $0x18] sm:$0xff]
      %v259 = vld [vmem:[#allocation9 + $0x20] sm:$0xff]
      %v260 = vld [vmem:[#allocation9 + $0x28] sm:$0xff]
      %v261 = vld [vmem:[#allocation9 + $0x30] sm:$0xff]
      %v262 = vld [vmem:[#allocation9 + $0x38] sm:$0xff]
      %v263 = vld [vmem:[#allocation9 + $0x40] sm:$0xff]
      %v264 = vld [vmem:[#allocation9 + $0x48] sm:$0xff]
      %v265 = vld [vmem:[#allocation9 + $0x50] sm:$0xff]
      %v266 = vld [vmem:[#allocation9 + $0x58] sm:$0xff]
      %v267 = vld [vmem:[#allocation9 + $0x60] sm:$0xff]
      %v268 = vld [vmem:[#allocation9 + $0x68] sm:$0xff]
      %v269 = vld [vmem:[#allocation9 + $0x70] sm:$0xff]
      %v270 = vld [vmem:[#allocation9 + $0x78] sm:$0xff]
      %v271 = vld [vmem:[#allocation9 + $0x80] sm:$0xff]
      %v272 = vld [vmem:[#allocation9 + $0x88] sm:$0xff]
      %v273 = vld [vmem:[#allocation9 + $0x90] sm:$0xff]
      %v274 = vld [vmem:[#allocation9 + $0x98] sm:$0xff]
      %v275 = vld [vmem:[#allocation9 + $0xa0] sm:$0xff]
      %v276 = vld [vmem:[#allocation9 + $0xa8] sm:$0xff]
      %v277 = vld [vmem:[#allocation9 + $0xb0] sm:$0xff]
      %v278 = vld [vmem:[#allocation9 + $0xb8] sm:$0xff]
      %v279 = vld [vmem:[#allocation9 + $0xc0] sm:$0xff]
      %v280 = vld [vmem:[#allocation9 + $0xc8] sm:$0xff]
      %v281 = vld [vmem:[#allocation9 + $0xd0] sm:$0xff]
      %v282 = vld [vmem:[#allocation9 + $0xd8] sm:$0xff]
      %v283 = vld [vmem:[#allocation9 + $0xe0] sm:$0xff]
      %v284 = vld [vmem:[#allocation9 + $0xe8] sm:$0xff]
      %v285 = vld [vmem:[#allocation9 + $0xf0] sm:$0xff]
      %v286 = vld [vmem:[#allocation9 + $0xf8] sm:$0xff]
      %v287 = vld [vmem:[#allocation9 + $0x100] sm:$0xff]
      %v288 = vld [vmem:[#allocation9 + $0x108] sm:$0xff]
      %v289 = vld [vmem:[#allocation9 + $0x110] sm:$0xff]
      %v290 = vld [vmem:[#allocation9 + $0x118] sm:$0xff]
      %v291 = vld [vmem:[#allocation9 + $0x120] sm:$0xff]
      %v292 = vld [vmem:[#allocation9 + $0x128] sm:$0xff]
      %v293 = vld [vmem:[#allocation9 + $0x130] sm:$0xff]
      %v294 = vld [vmem:[#allocation9 + $0x138] sm:$0xff]
      %v295 = vld [vmem:[#allocation9 + $0x140] sm:$0xff]
      %v296 = vld [vmem:[#allocation9 + $0x148] sm:$0xff]
      %v297 = vld [vmem:[#allocation9 + $0x150] sm:$0xff]
      %v298 = vld [vmem:[#allocation9 + $0x158] sm:$0xff]
      %v299 = vld [vmem:[#allocation9 + $0x160] sm:$0xff]
      %v300 = vld [vmem:[#allocation9 + $0x168] sm:$0xff]
      %v301 = vld [vmem:[#allocation9 + $0x170] sm:$0xff]
      %v302 = vld [vmem:[#allocation9 + $0x178] sm:$0xff]
      %v303 = vld [vmem:[#allocation9 + $0x180] sm:$0xff]
      %v304 = vld [vmem:[#allocation9 + $0x188] sm:$0xff]
      %v305 = vld [vmem:[#allocation9 + $0x190] sm:$0xff]
      %v306 = vld [vmem:[#allocation9 + $0x198] sm:$0xff]
      %v307 = vld [vmem:[#allocation9 + $0x1a0] sm:$0xff]
      %v308 = vld [vmem:[#allocation9 + $0x1a8] sm:$0xff]
      %v309 = vld [vmem:[#allocation9 + $0x1b0] sm:$0xff]
      %v310 = vld [vmem:[#allocation9 + $0x1b8] sm:$0xff]
      %v311 = vld [vmem:[#allocation9 + $0x1c0] sm:$0xff]
      %v312 = vld [vmem:[#allocation9 + $0x1c8] sm:$0xff]
      %v313 = vld [vmem:[#allocation9 + $0x1d0] sm:$0xff]
      %v314 = vld [vmem:[#allocation9 + $0x1d8] sm:$0xff]
      %v315 = vld [vmem:[#allocation9 + $0x1e0] sm:$0xff]
      %v316 = vld [vmem:[#allocation9 + $0x1e8] sm:$0xff]
      %v317 = vld [vmem:[#allocation9 + $0x1f0] sm:$0xff]
      %v318 = vld [vmem:[#allocation9 + $0x1f8] sm:$0xff]
      %v319 = vld [vmem:[#allocation9 + $0x200] sm:$0xff]
      %v320 = vld [vmem:[#allocation9 + $0x208] sm:$0xff]
      %v321 = vld [vmem:[#allocation9 + $0x210] sm:$0xff]
      %v322 = vld [vmem:[#allocation9 + $0x218] sm:$0xff]
      %v323 = vld [vmem:[#allocation9 + $0x220] sm:$0xff]
      %v324 = vld [vmem:[#allocation9 + $0x228] sm:$0xff]
      %v325 = vld [vmem:[#allocation9 + $0x230] sm:$0xff]
      %v326 = vld [vmem:[#allocation9 + $0x238] sm:$0xff]
      %v327 = vld [vmem:[#allocation9 + $0x240] sm:$0xff]
      %v328 = vld [vmem:[#allocation9 + $0x248] sm:$0xff]
      %v329 = vld [vmem:[#allocation9 + $0x250] sm:$0xff]
      %v330 = vld [vmem:[#allocation9 + $0x258] sm:$0xff]
      %v331 = vld [vmem:[#allocation9 + $0x260] sm:$0xff]
      %v332 = vld [vmem:[#allocation9 + $0x268] sm:$0xff]
      %v333 = vld [vmem:[#allocation9 + $0x270] sm:$0xff]
      %v334 = vld [vmem:[#allocation9 + $0x278] sm:$0xff]
      %v335 = vld [vmem:[#allocation9 + $0x280] sm:$0xff]
      %v336 = vld [vmem:[#allocation9 + $0x288] sm:$0xff]
      %v337 = vld [vmem:[#allocation9 + $0x290] sm:$0xff]
      %v338 = vld [vmem:[#allocation9 + $0x298] sm:$0xff]
      %v339 = vld [vmem:[#allocation9 + $0x2a0] sm:$0xff]
      %v340 = vld [vmem:[#allocation9 + $0x2a8] sm:$0xff]
      %v341 = vld [vmem:[#allocation9 + $0x2b0] sm:$0xff]
      %v342 = vld [vmem:[#allocation9 + $0x2b8] sm:$0xff]
      %v343 = vld [vmem:[#allocation9 + $0x2c0] sm:$0xff]
      %v344 = vld [vmem:[#allocation9 + $0x2c8] sm:$0xff]
      %v345 = vld [vmem:[#allocation9 + $0x2d0] sm:$0xff]
      %v346 = vld [vmem:[#allocation9 + $0x2d8] sm:$0xff]
      %v347 = vld [vmem:[#allocation9 + $0x2e0] sm:$0xff]
      %v348 = vld [vmem:[#allocation9 + $0x2e8] sm:$0xff]
      %v349 = vld [vmem:[#allocation9 + $0x2f0] sm:$0xff]
      %v350 = vld [vmem:[#allocation9 + $0x2f8] sm:$0xff]
      %v351 = vld [vmem:[#allocation9 + $0x300] sm:$0xff]
      %v352 = vld [vmem:[#allocation9 + $0x308] sm:$0xff]
      %v353 = vld [vmem:[#allocation9 + $0x310] sm:$0xff]
      %v354 = vld [vmem:[#allocation9 + $0x318] sm:$0xff]
      %v355 = vld [vmem:[#allocation9 + $0x320] sm:$0xff]
      %v356 = vld [vmem:[#allocation9 + $0x328] sm:$0xff]
      %v357 = vld [vmem:[#allocation9 + $0x330] sm:$0xff]
      %v358 = vld [vmem:[#allocation9 + $0x338] sm:$0xff]
      %v359 = vld [vmem:[#allocation9 + $0x340] sm:$0xff]
      %v360 = vld [vmem:[#allocation9 + $0x348] sm:$0xff]
      %v361 = vld [vmem:[#allocation9 + $0x350] sm:$0xff]
      %v362 = vld [vmem:[#allocation9 + $0x358] sm:$0xff]
      %v363 = vld [vmem:[#allocation9 + $0x360] sm:$0xff]
      %v364 = vld [vmem:[#allocation9 + $0x368] sm:$0xff]
      %v365 = vld [vmem:[#allocation9 + $0x370] sm:$0xff]
      %v366 = vld [vmem:[#allocation9 + $0x378] sm:$0xff]
      %v367 = vld [vmem:[#allocation9 + $0x380] sm:$0xff]
      %v368 = vld [vmem:[#allocation9 + $0x388] sm:$0xff]
      %v369 = vld [vmem:[#allocation9 + $0x390] sm:$0xff]
      %v370 = vld [vmem:[#allocation9 + $0x398] sm:$0xff]
      %v371 = vld [vmem:[#allocation9 + $0x3a0] sm:$0xff]
      %v372 = vld [vmem:[#allocation9 + $0x3a8] sm:$0xff]
      %v373 = vld [vmem:[#allocation9 + $0x3b0] sm:$0xff]
      %v374 = vld [vmem:[#allocation9 + $0x3b8] sm:$0xff]
      %v375 = vld [vmem:[#allocation9 + $0x3c0] sm:$0xff]
      %v376 = vld [vmem:[#allocation9 + $0x3c8] sm:$0xff]
      %v377 = vld [vmem:[#allocation9 + $0x3d0] sm:$0xff]
      %v378 = vld [vmem:[#allocation9 + $0x3d8] sm:$0xff]
      %v379 = vld [vmem:[#allocation9 + $0x3e0] sm:$0xff]
      %v380 = vld [vmem:[#allocation9 + $0x3e8] sm:$0xff]
      %v381 = vld [vmem:[#allocation9 + $0x3f0] sm:$0xff]
      %v382 = vld [vmem:[#allocation9 + $0x3f8] sm:$0xff]
      %v383 = vld [vmem:[%s4] sm:$0x3]
      %v385 = vperm.slane %v383, 0
      %v386 = vperm.slane %v383, 1
      %389 = vmatpush.msra.mxu0 %v285
      %390 = vmatpush.msra.mxu0 %v283
      %391 = vmatpush.msra.mxu0 %v281
      %392 = vmatpush.msra.mxu0 %v279
      %393 = vmatpush.msra.mxu0 %v277
      %394 = vmatpush.msra.mxu0 %v275
      %395 = vmatpush.msra.mxu0 %v273
      %396 = vmatpush.msra.mxu0 %v271
      %397 = vmatpush.msra.mxu0 %v269
      %398 = vmatpush.msra.mxu0 %v267
      %399 = vmatpush.msra.mxu0 %v265
      %400 = vmatpush.msra.mxu0 %v263
      %401 = vmatpush.msra.mxu0 %v261
      %402 = vmatpush.msra.mxu0 %v259
      %403 = vmatpush.msra.mxu0 %v257
      %404 = vmatpush.msra.mxu0 %v255
      %405 = vmatmul.f32.gmra.mxu0 %v251
      %v406 = vpop.f32.mrf.mxu0
      %v407 = vadd.f32 %v385, %v406
      %408 = vdwg.mxu0
      %409 = vmatpush.msra.mxu0 %v317
      %410 = vmatpush.msra.mxu0 %v315
      %411 = vmatpush.msra.mxu0 %v313
      %412 = vmatpush.msra.mxu0 %v311
      %413 = vmatpush.msra.mxu0 %v309
      %414 = vmatpush.msra.mxu0 %v307
      %415 = vmatpush.msra.mxu0 %v305
      %416 = vmatpush.msra.mxu0 %v303
      %417 = vmatpush.msra.mxu0 %v301
      %418 = vmatpush.msra.mxu0 %v299
      %419 = vmatpush.msra.mxu0 %v297
      %420 = vmatpush.msra.mxu0 %v295
      %421 = vmatpush.msra.mxu0 %v293
      %422 = vmatpush.msra.mxu0 %v291
      %423 = vmatpush.msra.mxu0 %v289
      %424 = vmatpush.msra.mxu0 %v287
      %425 = vmatmul.f32.gmra.mxu0 %v252
      %v426 = vpop.f32.mrf.mxu0
      %v427 = vadd.f32 %v407, %v426
      %428 = vdwg.mxu0
      %429 = vmatpush.msra.mxu0 %v349
      %430 = vmatpush.msra.mxu0 %v347
      %431 = vmatpush.msra.mxu0 %v345
      %432 = vmatpush.msra.mxu0 %v343
      %433 = vmatpush.msra.mxu0 %v341
      %434 = vmatpush.msra.mxu0 %v339
      %435 = vmatpush.msra.mxu0 %v337
      %436 = vmatpush.msra.mxu0 %v335
      %437 = vmatpush.msra.mxu0 %v333
      %438 = vmatpush.msra.mxu0 %v331
      %439 = vmatpush.msra.mxu0 %v329
      %440 = vmatpush.msra.mxu0 %v327
      %441 = vmatpush.msra.mxu0 %v325
      %442 = vmatpush.msra.mxu0 %v323
      %443 = vmatpush.msra.mxu0 %v321
      %444 = vmatpush.msra.mxu0 %v319
      %445 = vmatmul.f32.gmra.mxu0 %v253
      %v446 = vpop.f32.mrf.mxu0
      %v447 = vadd.f32 %v427, %v446
      %448 = vdwg.mxu0
      %449 = vmatpush.msra.mxu0 %v381
      %450 = vmatpush.msra.mxu0 %v379
      %451 = vmatpush.msra.mxu0 %v377
      %452 = vmatpush.msra.mxu0 %v375
      %453 = vmatpush.msra.mxu0 %v373
      %454 = vmatpush.msra.mxu0 %v371
      %455 = vmatpush.msra.mxu0 %v369
      %456 = vmatpush.msra.mxu0 %v367
      %457 = vmatpush.msra.mxu0 %v365
      %458 = vmatpush.msra.mxu0 %v363
      %459 = vmatpush.msra.mxu0 %v361
      %460 = vmatpush.msra.mxu0 %v359
      %461 = vmatpush.msra.mxu0 %v357
      %462 = vmatpush.msra.mxu0 %v355
      %463 = vmatpush.msra.mxu0 %v353
      %464 = vmatpush.msra.mxu0 %v351
      %465 = vmatmul.f32.gmra.mxu0 %v254
      %v466 = vpop.f32.mrf.mxu0
      %v467 = vadd.f32 %v447, %v466
      %468 = vdwg.mxu0
      %469 = vmatpush.msra.mxu0 %v286
      %470 = vmatpush.msra.mxu0 %v284
      %471 = vmatpush.msra.mxu0 %v282
      %472 = vmatpush.msra.mxu0 %v280
      %473 = vmatpush.msra.mxu0 %v278
      %474 = vmatpush.msra.mxu0 %v276
      %475 = vmatpush.msra.mxu0 %v274
      %476 = vmatpush.msra.mxu0 %v272
      %477 = vmatpush.msra.mxu0 %v270
      %478 = vmatpush.msra.mxu0 %v268
      %479 = vmatpush.msra.mxu0 %v266
      %480 = vmatpush.msra.mxu0 %v264
      %481 = vmatpush.msra.mxu0 %v262
      %482 = vmatpush.msra.mxu0 %v260
      %483 = vmatpush.msra.mxu0 %v258
      %484 = vmatpush.msra.mxu0 %v256
      %485 = vmatmul.f32.gmra.mxu0 %v251
      %v486 = vpop.f32.mrf.mxu0
      %v487 = vadd.f32 %v386, %v486
      %488 = vdwg.mxu0
      %489 = vmatpush.msra.mxu0 %v318
      %490 = vmatpush.msra.mxu0 %v316
      %491 = vmatpush.msra.mxu0 %v314
      %492 = vmatpush.msra.mxu0 %v312
      %493 = vmatpush.msra.mxu0 %v310
      %494 = vmatpush.msra.mxu0 %v308
      %495 = vmatpush.msra.mxu0 %v306
      %496 = vmatpush.msra.mxu0 %v304
      %497 = vmatpush.msra.mxu0 %v302
      %498 = vmatpush.msra.mxu0 %v300
      %499 = vmatpush.msra.mxu0 %v298
      %500 = vmatpush.msra.mxu0 %v296
      %501 = vmatpush.msra.mxu0 %v294
      %502 = vmatpush.msra.mxu0 %v292
      %503 = vmatpush.msra.mxu0 %v290
      %504 = vmatpush.msra.mxu0 %v288
      %505 = vmatmul.f32.gmra.mxu0 %v252
      %v506 = vpop.f32.mrf.mxu0
      %v507 = vadd.f32 %v487, %v506
      %508 = vdwg.mxu0
      %509 = vmatpush.msra.mxu0 %v350
      %510 = vmatpush.msra.mxu0 %v348
      %511 = vmatpush.msra.mxu0 %v346
      %512 = vmatpush.msra.mxu0 %v344
      %513 = vmatpush.msra.mxu0 %v342
      %514 = vmatpush.msra.mxu0 %v340
      %515 = vmatpush.msra.mxu0 %v338
      %516 = vmatpush.msra.mxu0 %v336
      %517 = vmatpush.msra.mxu0 %v334
      %518 = vmatpush.msra.mxu0 %v332
      %519 = vmatpush.msra.mxu0 %v330
      %520 = vmatpush.msra.mxu0 %v328
      %521 = vmatpush.msra.mxu0 %v326
      %522 = vmatpush.msra.mxu0 %v324
      %523 = vmatpush.msra.mxu0 %v322
      %524 = vmatpush.msra.mxu0 %v320
      %525 = vmatmul.f32.gmra.mxu0 %v253
      %v526 = vpop.f32.mrf.mxu0
      %v527 = vadd.f32 %v507, %v526
      %528 = vdwg.mxu0
      %529 = vmatpush.msra.mxu0 %v382
      %530 = vmatpush.msra.mxu0 %v380
      %531 = vmatpush.msra.mxu0 %v378
      %532 = vmatpush.msra.mxu0 %v376
      %533 = vmatpush.msra.mxu0 %v374
      %534 = vmatpush.msra.mxu0 %v372
      %535 = vmatpush.msra.mxu0 %v370
      %536 = vmatpush.msra.mxu0 %v368
      %537 = vmatpush.msra.mxu0 %v366
      %538 = vmatpush.msra.mxu0 %v364
      %539 = vmatpush.msra.mxu0 %v362
      %540 = vmatpush.msra.mxu0 %v360
      %541 = vmatpush.msra.mxu0 %v358
      %542 = vmatpush.msra.mxu0 %v356
      %543 = vmatpush.msra.mxu0 %v354
      %544 = vmatpush.msra.mxu0 %v352
      %545 = vmatmul.f32.gmra.mxu0 %v254
      %v546 = vpop.f32.mrf.mxu0
      %v547 = vadd.f32 %v527, %v546
      %548 = vdwg.mxu0
      %vm549 = vcmp.gt.f32.partialorder %v467, 0.0
      %vm550 = vcmp.gt.f32.partialorder %v547, 0.0
      %v551 = vmul.f32 %v467, 0.01
      %v552 = vmul.f32 %v547, 0.01
      %v553 = vsel %vm549, %v467, %v551
      %v554 = vsel %vm550, %v547, %v552
      %v555 = vld [vmem:[#allocation11] sm:$0xff]
      %v556 = vld [vmem:[#allocation11 + $0x8] sm:$0xff]
      %v557 = vld [vmem:[#allocation11 + $0x10] sm:$0xff]
      %v558 = vld [vmem:[#allocation11 + $0x18] sm:$0xff]
      %v559 = vld [vmem:[#allocation11 + $0x20] sm:$0xff]
      %v560 = vld [vmem:[#allocation11 + $0x28] sm:$0xff]
      %v561 = vld [vmem:[#allocation11 + $0x30] sm:$0xff]
      %v562 = vld [vmem:[#allocation11 + $0x38] sm:$0xff]
      %v563 = vld [vmem:[#allocation11 + $0x40] sm:$0xff]
      %v564 = vld [vmem:[#allocation11 + $0x48] sm:$0xff]
      %v565 = vld [vmem:[#allocation11 + $0x50] sm:$0xff]
      %v566 = vld [vmem:[#allocation11 + $0x58] sm:$0xff]
      %v567 = vld [vmem:[#allocation11 + $0x60] sm:$0xff]
      %v568 = vld [vmem:[#allocation11 + $0x68] sm:$0xff]
      %v569 = vld [vmem:[#allocation11 + $0x70] sm:$0xff]
      %v570 = vld [vmem:[#allocation11 + $0x78] sm:$0xff]
      %v571 = vld [vmem:[#allocation11 + $0x80] sm:$0xff]
      %v572 = vld [vmem:[#allocation11 + $0x88] sm:$0xff]
      %v573 = vld [vmem:[#allocation11 + $0x90] sm:$0xff]
      %v574 = vld [vmem:[#allocation11 + $0x98] sm:$0xff]
      %v575 = vld [vmem:[#allocation11 + $0xa0] sm:$0xff]
      %v576 = vld [vmem:[#allocation11 + $0xa8] sm:$0xff]
      %v577 = vld [vmem:[#allocation11 + $0xb0] sm:$0xff]
      %v578 = vld [vmem:[#allocation11 + $0xb8] sm:$0xff]
      %v579 = vld [vmem:[#allocation11 + $0xc0] sm:$0xff]
      %v580 = vld [vmem:[#allocation11 + $0xc8] sm:$0xff]
      %v581 = vld [vmem:[#allocation11 + $0xd0] sm:$0xff]
      %v582 = vld [vmem:[#allocation11 + $0xd8] sm:$0xff]
      %v583 = vld [vmem:[#allocation11 + $0xe0] sm:$0xff]
      %v584 = vld [vmem:[#allocation11 + $0xe8] sm:$0xff]
      %v585 = vld [vmem:[#allocation11 + $0xf0] sm:$0xff]
      %v586 = vld [vmem:[#allocation11 + $0xf8] sm:$0xff]
      %v587 = vld [vmem:[%s6] sm:$0x1]
      %v589 = vperm.slane %v587, 0
      %591 = vmatpush.msra.mxu0 %v570
      %592 = vmatpush.msra.mxu0 %v569
      %593 = vmatpush.msra.mxu0 %v568
      %594 = vmatpush.msra.mxu0 %v567
      %595 = vmatpush.msra.mxu0 %v566
      %596 = vmatpush.msra.mxu0 %v565
      %597 = vmatpush.msra.mxu0 %v564
      %598 = vmatpush.msra.mxu0 %v563
      %599 = vmatpush.msra.mxu0 %v562
      %600 = vmatpush.msra.mxu0 %v561
      %601 = vmatpush.msra.mxu0 %v560
      %602 = vmatpush.msra.mxu0 %v559
      %603 = vmatpush.msra.mxu0 %v558
      %604 = vmatpush.msra.mxu0 %v557
      %605 = vmatpush.msra.mxu0 %v556
      %606 = vmatpush.msra.mxu0 %v555
      %607 = vmatmul.f32.gmra.mxu0 %v553
      %v608 = vpop.f32.mrf.mxu0
      %v609 = vadd.f32 %v589, %v608
      %610 = vdwg.mxu0
      %611 = vmatpush.msra.mxu0 %v586
      %612 = vmatpush.msra.mxu0 %v585
      %613 = vmatpush.msra.mxu0 %v584
      %614 = vmatpush.msra.mxu0 %v583
      %615 = vmatpush.msra.mxu0 %v582
      %616 = vmatpush.msra.mxu0 %v581
      %617 = vmatpush.msra.mxu0 %v580
      %618 = vmatpush.msra.mxu0 %v579
      %619 = vmatpush.msra.mxu0 %v578
      %620 = vmatpush.msra.mxu0 %v577
      %621 = vmatpush.msra.mxu0 %v576
      %622 = vmatpush.msra.mxu0 %v575
      %623 = vmatpush.msra.mxu0 %v574
      %624 = vmatpush.msra.mxu0 %v573
      %625 = vmatpush.msra.mxu0 %v572
      %626 = vmatpush.msra.mxu0 %v571
      %627 = vmatmul.f32.gmra.mxu0 %v554
      %v628 = vpop.f32.mrf.mxu0
      %v629 = vadd.f32 %v609, %v628
      %630 = vdwg.mxu0
      %v631 = vmax.f32 %v629, 0.0
      %v632 = vand.u32 2147483647, %v629
      %v633 = vsub.f32 0.0, %v632
      %v634 = vmul.f32 %v633, 1.442695
      %v635 = vpow.pop %v634
      %v636 = vadd.f32 %v635, 1.0
      %v637 = vlog2.pop %v636
      %v638 = vmul.f32 %v637, 0.6931472
      %v639 = vmul.f32 -0.5, %v635
      %v640 = vadd.f32 %v639, 1.0
      %v641 = vmul.f32 %v640, %v635
      %v642 = vand.u32 2147483647, %v635
      %vm643 = vcmp.lt.f32.partialorder %v642, 0.0004427343
      %v644 = vsel %vm643, %v641, %v638
      %v645 = vadd.f32 %v631, %v644
      %646 = vst [vmem:[#allocation12] sm:$0xff] %v645
    $region57: #{tpu_custom_call.1} parent=1 // pred_fallthru
      _
    // Predicated region
    $region58: #{tpu_custom_call.1} parent=1 // pred_check
      _
    $region59: #{tpu_custom_call.1} parent=1 // pred_check_branch
      %648 = sbr.rel (0) target = $region61
    $region60: #{tpu_custom_call.1} parent=1 // pred_region
      %650 = vsyncadd [#allocation5], 0
      %s652 = sshll.u32 [#allocation12], 4
      %s653 = int_to_ptr.vmem [resolvable:$true] %s652
      %s654 = sshll.u32 %s7, 4
      %s655 = int_to_ptr.hbm [resolvable:$true] %s654
      %657 = dma.vmem_to_hbm [thread:$0]  %s653, 128, %s655, [#allocation5]
    $region61: #{tpu_custom_call.1} parent=1 // pred_fallthru
      _
    // Predicated region
    $region62: #{tpu_custom_call.1} parent=1 // pred_check
      _
    $region63: #{tpu_custom_call.1} parent=1 // pred_check_branch
      %659 = sbr.rel (0) target = $region65
    $region64: #{tpu_custom_call.1} parent=1 // pred_region
      %661 = dma.done [#allocation5], 128
    $region65: #{tpu_custom_call.1} parent=1 // pred_fallthru
      _
    %662 = vsyncpa [#allocation4], 1
    %663 = vsyncpa [#allocation7], 1
    %664 = vsyncpa [#allocation10], 1
    %665 = vsyncpa [#allocation5], 1

</llo_original>
